<compile_context>
chip_gen: v7x
topology: tpu7x:2x2x1
jax: 0.10.0
libtpu: 0.0.40
codegen_flags: <defaults>
</compile_context>

<pallas_src>
import functools

import jax
import jax.numpy as jnp
from jax.experimental import pallas as pl
from jax.experimental.pallas import tpu as pltpu


def _round_up(a, b):
    return (a + b - 1) // b * b


def _mlp_kernel(num_layers, nonlinearity, compute_dtype, act_dtype, *refs):
    """refs = (x_ref, w0, b0, w1, b1, ..., o_ref).

    x_ref : (TM, D_in) tile, natural layout, caller dtype (cast in-kernel)
    w_i   : (out_i, in_i), compute_dtype (torch layout, resident in VMEM)
    b_i   : (out_i, 1), float32 (resident; broadcasts over the TM lane axis)
    o_ref : (TM, out_last) tile, natural layout, out_dtype
    """
    x_ref = refs[0]
    o_ref = refs[-1]
    param_refs = refs[1:-1]
    assert len(param_refs) == 2 * num_layers

    if nonlinearity == "tanh":
        act = jnp.tanh
    elif nonlinearity == "relu":
        act = lambda v: jnp.maximum(v, 0.0)
    else:
        raise ValueError(f"Unsupported nonlinearity: {nonlinearity!r}")

    # Transpose into the lane-dense layout: the TM rows (multiple of 128) sit on
    # the 128-wide lane axis, the narrow (32/64) feature dims sit on sublanes.
    # The transpose runs on the XLU (idle otherwise); the cast on the VPU.
    h = x_ref[...].T.astype(compute_dtype)            # (D_in, TM)

    for i in range(num_layers):
        w = param_refs[2 * i][...]                     # (out_i, in_i)
        b = param_refs[2 * i + 1][...]                 # (out_i, 1)  float32
        # h^T_{l+1} = act(W_l @ h^T_l + b_l): MXU matmul, f32 accumulation.
        h32 = jnp.dot(w, h, preferred_element_type=jnp.float32) + b   # (out_i, TM)
        if i == num_layers - 1:
            # Final layer: activate in f32, transpose back to natural layout,
            # cast once into the output dtype.
            o_ref[...] = act(h32).T.astype(o_ref.dtype)
        else:
            # Intermediate layers: activate in act_dtype (bf16 on v6e/v7x),
            # then ensure the next matmul operand is in compute_dtype.
            h = act(h32.astype(act_dtype)).astype(compute_dtype)


def relational_model_forward(x, weights, biases, nonlinearity="tanh",
                             compute_dtype=jnp.bfloat16, act_dtype=None,
                             out_dtype=None, tile_m=4096, min_grid_steps=8):
    """x: [B, R, input_size]; weights[i]: (in_i, out_i); biases[i]: (out_i,).

    compute_dtype : MXU input dtype (bf16 in production; f32 is a test harness).
    act_dtype     : dtype of intermediate activations (default compute_dtype;
                    pass jnp.float32 on v5e, whose EUP has no bf16 path).
    out_dtype     : HBM output dtype (default x.dtype; bf16 halves the largest
                    HBM stream when the consumer tolerates it).
    """
    B, R, D_in = x.shape
    M = B * R
    num_layers = len(weights)
    assert num_layers >= 1
    out_size = weights[-1].shape[1]
    if act_dtype is None:
        act_dtype = compute_dtype
    if out_dtype is None:
        out_dtype = x.dtype

    # Row tile: large to amortise per-grid-step overhead, but capped so the grid
    # has >= min_grid_steps steps (when M allows) so v7x's two TensorCores both
    # get work under dimension_semantics=("parallel",).
    TM = min(tile_m, max(128, _round_up(pl.cdiv(M, min_grid_steps), 128)))
    grid = (pl.cdiv(M, TM),)   # ragged tail block handled by Pallas masking

    x2d = x.reshape(M, D_in)   # free: contiguous reshape, no pad/cast/transpose

    # Interleave params: w0, b0, w1, b1, ...  Weights in torch (out, in) layout.
    # These are a few KB -> wrapper-side prep cost is negligible and they are
    # DMA'd into VMEM exactly once (constant index maps below).
    params = []
    for w, b in zip(weights, biases):
        params.append(jnp.asarray(w).T.astype(compute_dtype))           # (out_i, in_i)
        params.append(jnp.asarray(b).reshape(-1, 1).astype(jnp.float32))  # (out_i, 1)

    in_specs = [pl.BlockSpec((TM, D_in), lambda i: (i, 0))]
    for p in params:
        in_specs.append(pl.BlockSpec(p.shape, lambda i: (0, 0)))  # resident

    kernel = functools.partial(_mlp_kernel, num_layers, nonlinearity,
                               compute_dtype, act_dtype)

    out2d = pl.pallas_call(
        kernel,
        out_shape=jax.ShapeDtypeStruct((M, out_size), out_dtype),
        grid=grid,
        in_specs=in_specs,
        out_specs=pl.BlockSpec((TM, out_size), lambda i: (i, 0)),
        compiler_params=pltpu.CompilerParams(
            dimension_semantics=("parallel",)),
    )(x2d, *params)

    return out2d.reshape(B, R, out_size)


def init_params(key, layer_sizes):
    """Deterministic init mimicking nn.Linear default (uniform +-1/sqrt(fan_in))."""
    weights, biases = [], []
    for i in range(len(layer_sizes) - 1):
        fan_in, fan_out = layer_sizes[i], layer_sizes[i + 1]
        key, kw, kb = jax.random.split(key, 3)
        bound = 1.0 / jnp.sqrt(fan_in)
        # stored as (in, out) == W_torch.T
        w = jax.random.uniform(kw, (fan_in, fan_out), jnp.float32, -bound, bound)
        b = jax.random.uniform(kb, (fan_out,), jnp.float32, -bound, bound)
        weights.append(w)
        biases.append(b)
    return weights, biases


def reference_forward(x, weights, biases, nonlinearity="tanh"):
    act = jnp.tanh if nonlinearity == "tanh" else (lambda v: jnp.maximum(v, 0.0))
    B, R, D = x.shape
    h = x.reshape(-1, D)
    for w, b in zip(weights, biases):
        h = act(h @ w + b)
    return h.reshape(B, R, -1)


if __name__ == "__main__":
    # RelationalModel(input_size=32, model_size=[64, 32]) -> layer_sizes [32, 64, 32]
    input_size = 32
    model_size = [64, 32]
    layer_sizes = [input_size] + model_size

    key = jax.random.PRNGKey(0)
    weights, biases = init_params(key, layer_sizes)

    # Case 1: small shape from the module spec (single partial tile, M=16 < TM=128).
    batch, n_relations = 2, 8
    key, kx = jax.random.split(key)
    x = jax.random.normal(kx, (batch, n_relations, input_size), jnp.float32)
    ref = reference_forward(x, weights, biases, "tanh")

    # bf16 MXU path (production default) — relaxed tolerance vs the f32 reference.
    out_bf16 = relational_model_forward(x, weights, biases, "tanh",
                                        compute_dtype=jnp.bfloat16)
    out_bf16 = jax.block_until_ready(out_bf16)
    assert out_bf16.shape == (batch, n_relations, model_size[-1])
    assert jnp.allclose(out_bf16, ref, atol=3e-2, rtol=3e-2)

    # f32 path — tight check of the kernel math itself (test-only harness).
    out_f32 = relational_model_forward(x, weights, biases, "tanh",
                                       compute_dtype=jnp.float32)
    out_f32 = jax.block_until_ready(out_f32)
    assert jnp.allclose(out_f32, ref, atol=1e-4, rtol=1e-4)

    # relu branch.
    ref_relu = reference_forward(x, weights, biases, "relu")
    out_relu = relational_model_forward(x, weights, biases, "relu",
                                        compute_dtype=jnp.float32)
    out_relu = jax.block_until_ready(out_relu)
    assert jnp.allclose(out_relu, ref_relu, atol=1e-4, rtol=1e-4)

    # Case 2: larger M exercises the multi-tile grid + masked ragged tail block
    # (M = 1200 -> TM = 256, grid = 5, last block has 176 valid rows, no padding).
    batch2, n_relations2 = 4, 300
    key, kx2 = jax.random.split(key)
    x2 = jax.random.normal(kx2, (batch2, n_relations2, input_size), jnp.float32)
    ref2 = reference_forward(x2, weights, biases, "tanh")

    out2_f32 = relational_model_forward(x2, weights, biases, "tanh",
                                        compute_dtype=jnp.float32)
    out2_f32 = jax.block_until_ready(out2_f32)
    assert out2_f32.shape == (batch2, n_relations2, model_size[-1])
    assert jnp.allclose(out2_f32, ref2, atol=1e-4, rtol=1e-4)

    # bf16 compute + bf16 output (smallest HBM footprint path).
    out2_bf16 = relational_model_forward(x2, weights, biases, "tanh",
                                         compute_dtype=jnp.bfloat16,
                                         out_dtype=jnp.bfloat16)
    out2_bf16 = jax.block_until_ready(out2_bf16)
    assert out2_bf16.dtype == jnp.bfloat16
    assert jnp.allclose(out2_bf16.astype(jnp.float32), ref2, atol=3e-2, rtol=3e-2)

    print("KERNEL_OK")
</pallas_src>

<mosaic_0001>
module attributes {stable_mosaic.version = 11 : i64} {
  func.func @_mlp_kernel(%arg0: i32, %arg1: memref<128x32xf32, #tpu.memory_space<vmem>>, %arg2: memref<64x32xbf16, #tpu.memory_space<vmem>>, %arg3: memref<64x1xf32, #tpu.memory_space<vmem>>, %arg4: memref<32x64xbf16, #tpu.memory_space<vmem>>, %arg5: memref<32x1xf32, #tpu.memory_space<vmem>>, %arg6: memref<128x32xf32, #tpu.memory_space<vmem>>) attributes {dimension_semantics = [#tpu.dimension_semantics<parallel>], iteration_bounds = array<i64: 1>, scalar_prefetch = 0 : i64, scratch_operands = 0 : i64, tpu.core_type = #tpu.core_type<tc>, window_params = [{transform_indices = @transform_0, window_bounds = array<i64: 128, 32>}, {pipeline_mode = #tpu.pipeline_mode<synchronous>, transform_indices = @transform_1, window_bounds = array<i64: 64, 32>}, {pipeline_mode = #tpu.pipeline_mode<synchronous>, transform_indices = @transform_2, window_bounds = array<i64: 64, 1>}, {pipeline_mode = #tpu.pipeline_mode<synchronous>, transform_indices = @transform_3, window_bounds = array<i64: 32, 64>}, {pipeline_mode = #tpu.pipeline_mode<synchronous>, transform_indices = @transform_4, window_bounds = array<i64: 32, 1>}, {transform_indices = @transform_5, window_bounds = array<i64: 128, 32>}]} {
    %c0 = arith.constant 0 : index
    %c0_0 = arith.constant 0 : index
    %0 = vector.load %arg1[%c0, %c0_0] : memref<128x32xf32, #tpu.memory_space<vmem>>, vector<128x32xf32>
    %1 = tpu.transpose %0, [1, 0] : vector<128x32xf32> -> vector<32x128xf32>
    %2 = arith.truncf %1 : vector<32x128xf32> to vector<32x128xbf16>
    %c0_1 = arith.constant 0 : index
    %c0_2 = arith.constant 0 : index
    %3 = vector.load %arg2[%c0_1, %c0_2] : memref<64x32xbf16, #tpu.memory_space<vmem>>, vector<64x32xbf16>
    %c0_3 = arith.constant 0 : index
    %c0_4 = arith.constant 0 : index
    %4 = vector.load %arg3[%c0_3, %c0_4] : memref<64x1xf32, #tpu.memory_space<vmem>>, vector<64x1xf32>
    %cst = arith.constant dense<0.000000e+00> : vector<64x128xf32>
    %5 = tpu.matmul %3, %2, %cst {dimension_numbers = #tpu.dot_dimension_numbers<[1], [0], [0], [1], [0, 0, 1, 1], [], []>} : vector<64x32xbf16>, vector<32x128xbf16>, vector<64x128xf32> -> vector<64x128xf32>
    %6 = vector.broadcast %4 : vector<64x1xf32> to vector<64x128xf32>
    %7 = arith.addf %5, %6 : vector<64x128xf32>
    %8 = arith.truncf %7 : vector<64x128xf32> to vector<64x128xbf16>
    %9 = math.tanh %8 : vector<64x128xbf16>
    %c0_5 = arith.constant 0 : index
    %c0_6 = arith.constant 0 : index
    %10 = vector.load %arg4[%c0_5, %c0_6] : memref<32x64xbf16, #tpu.memory_space<vmem>>, vector<32x64xbf16>
    %c0_7 = arith.constant 0 : index
    %c0_8 = arith.constant 0 : index
    %11 = vector.load %arg5[%c0_7, %c0_8] : memref<32x1xf32, #tpu.memory_space<vmem>>, vector<32x1xf32>
    %cst_9 = arith.constant dense<0.000000e+00> : vector<32x128xf32>
    %12 = tpu.matmul %10, %9, %cst_9 {dimension_numbers = #tpu.dot_dimension_numbers<[1], [0], [0], [1], [0, 0, 1, 1], [], []>} : vector<32x64xbf16>, vector<64x128xbf16>, vector<32x128xf32> -> vector<32x128xf32>
    %13 = vector.broadcast %11 : vector<32x1xf32> to vector<32x128xf32>
    %14 = arith.addf %12, %13 : vector<32x128xf32>
    %15 = math.tanh %14 : vector<32x128xf32>
    %16 = tpu.transpose %15, [1, 0] : vector<32x128xf32> -> vector<128x32xf32>
    %c0_10 = arith.constant 0 : index
    %c0_11 = arith.constant 0 : index
    %17 = vector.load %arg6[%c0_10, %c0_11] : memref<128x32xf32, #tpu.memory_space<vmem>>, vector<128x32xf32>
    tpu.vector_store %arg6[%c0_10, %c0_11], %16 {strides = array<i32>} : memref<128x32xf32, #tpu.memory_space<vmem>>, vector<128x32xf32>,
    return
  }
  func.func @transform_0(%arg0: i32) -> (i32, i32) {
    %c0_i32 = arith.constant 0 : i32
    %c0_i32_0 = arith.constant 0 : i32
    return %arg0, %c0_i32 : i32, i32
  }
  func.func @transform_1(%arg0: i32) -> (i32, i32) {
    %c0_i32 = arith.constant 0 : i32
    %c0_i32_0 = arith.constant 0 : i32
    %c0_i32_1 = arith.constant 0 : i32
    return %c0_i32, %c0_i32_0 : i32, i32
  }
  func.func @transform_2(%arg0: i32) -> (i32, i32) {
    %c0_i32 = arith.constant 0 : i32
    %c0_i32_0 = arith.constant 0 : i32
    %c0_i32_1 = arith.constant 0 : i32
    return %c0_i32, %c0_i32_0 : i32, i32
  }
  func.func @transform_3(%arg0: i32) -> (i32, i32) {
    %c0_i32 = arith.constant 0 : i32
    %c0_i32_0 = arith.constant 0 : i32
    %c0_i32_1 = arith.constant 0 : i32
    return %c0_i32, %c0_i32_0 : i32, i32
  }
  func.func @transform_4(%arg0: i32) -> (i32, i32) {
    %c0_i32 = arith.constant 0 : i32
    %c0_i32_0 = arith.constant 0 : i32
    %c0_i32_1 = arith.constant 0 : i32
    return %c0_i32, %c0_i32_0 : i32, i32
  }
  func.func @transform_5(%arg0: i32) -> (i32, i32) {
    %c0_i32 = arith.constant 0 : i32
    %c0_i32_0 = arith.constant 0 : i32
    return %arg0, %c0_i32 : i32, i32
  }
}

</mosaic_0001>

<llo_original>
// kernel: tpu_custom_call.1
$region0: #{tpu_custom_call.1}
  #allocation0 [shape = 'u32[]', space=smem, size = 0x4, offset = 0x4, fixed_abs, tag = 'smem constant byte address 0x4 - core index']
  #allocation1 [shape = 'u32[144,128]{1,0:T(1,128)}', space=vmem, size = 0x12000, scoped, tag = 'internal scratch']
  %s0 = inlined_call_operand.vmem [shape: f32[16,32], index: 0, kind: input, shape index: {}]
  %s1 = inlined_call_operand.vmem [shape: bf16[64,32], index: 1, kind: input, shape index: {}]
  %s2 = inlined_call_operand.vmem [shape: f32[64,1], index: 2, kind: input, shape index: {}]
  %s3 = inlined_call_operand.vmem [shape: bf16[32,64], index: 3, kind: input, shape index: {}]
  %s4 = inlined_call_operand.vmem [shape: f32[32,1], index: 4, kind: input, shape index: {}]
  %s5 = inlined_call_operand.hbm [shape: f32[16,32], index: 5, kind: output, shape index: {}]
  %s6 = sld [smem:[#allocation0]]
  $region30: #{tpu_custom_call.1} parent=0
    _
  %s8 = ssub.s32 1, %s6
  %s9 = scalar_select 0, %s8, %s6
  $region1: #{tpu_custom_call.1} parent=0
    #allocation2 [shape = 'u8[65536]{0}', space=vmem, size = 0x10000, scoped, tag = 'output window, operand 0, single buffered']
    #allocation3 [shape = 's32[1]{0}', space=sflag, size = 0x4, scoped, tag = 'scoped memory for tpu_custom_call.1']
    %10 = vsyncpa [#allocation3], 0
    // Predicated region
    $region2: #{tpu_custom_call.1} parent=1 // pred_check
      _
    $region3: #{tpu_custom_call.1} parent=1 // pred_check_branch
      %12 = sbr.rel (0) target = $region5
    $region4: #{tpu_custom_call.1} parent=1 // pred_region
      _
    $region5: #{tpu_custom_call.1} parent=1 // pred_fallthru
      _
    // Predicated region
    $region6: #{tpu_custom_call.1} parent=1 // pred_check
      _
    $region7: #{tpu_custom_call.1} parent=1 // pred_check_branch
      %14 = sbr.rel (0) target = $region9
    $region8: #{tpu_custom_call.1} parent=1 // pred_region
      _
    $region9: #{tpu_custom_call.1} parent=1 // pred_fallthru
      _
    // Predicated region
    $region10: #{tpu_custom_call.1} parent=1 // pred_check
      _
    $region11: #{tpu_custom_call.1} parent=1 // pred_check_branch
      %16 = sbr.rel (0) target = $region13
    $region12: #{tpu_custom_call.1} parent=1 // pred_region
      _
    $region13: #{tpu_custom_call.1} parent=1 // pred_fallthru
      _
    // Predicated region
    $region14: #{tpu_custom_call.1} parent=1 // pred_check
      _
    $region15: #{tpu_custom_call.1} parent=1 // pred_check_branch
      %18 = sbr.rel (0) target = $region17
    $region16: #{tpu_custom_call.1} parent=1 // pred_region
      _
    $region17: #{tpu_custom_call.1} parent=1 // pred_fallthru
      _
    // Predicated region
    $region18: #{tpu_custom_call.1} parent=1 // pred_check
      _
    $region19: #{tpu_custom_call.1} parent=1 // pred_check_branch
      %20 = sbr.rel (0) target = $region21
    $region20: #{tpu_custom_call.1} parent=1 // pred_region
      _
    $region21: #{tpu_custom_call.1} parent=1 // pred_fallthru
      _
    %v22 = vld [vmem:[%s0] sm:$0xff]
    %v23 = vld [vmem:[%s0 + $0x8] sm:$0xff]
    %v24 = vld [vmem:[%s0 + $0x10] sm:$0xff]
    %v25 = vld [vmem:[%s0 + $0x18] sm:$0xff]
    %v26 = vld [vmem:[%s0 + $0x20] sm:$0xff]
    %v27 = vld [vmem:[%s0 + $0x28] sm:$0xff]
    %v28 = vld [vmem:[%s0 + $0x30] sm:$0xff]
    %v29 = vld [vmem:[%s0 + $0x38] sm:$0xff]
    %v30 = vld [vmem:[%s0 + $0x40] sm:$0xff]
    %v31 = vld [vmem:[%s0 + $0x48] sm:$0xff]
    %v32 = vld [vmem:[%s0 + $0x50] sm:$0xff]
    %v33 = vld [vmem:[%s0 + $0x58] sm:$0xff]
    %v34 = vld [vmem:[%s0 + $0x60] sm:$0xff]
    %v35 = vld [vmem:[%s0 + $0x68] sm:$0xff]
    %v36 = vld [vmem:[%s0 + $0x70] sm:$0xff]
    %v37 = vld [vmem:[%s0 + $0x78] sm:$0xff]
    %38 = vxpose.xlu0.b32.start [1/16] %v22, 128
    %39 = vxpose.xlu0.b32.cont [2/16] %v23, 128
    %40 = vxpose.xlu0.b32.cont [3/16] %v24, 128
    %41 = vxpose.xlu0.b32.cont [4/16] %v25, 128
    %42 = vxpose.xlu0.b32.cont [5/16] %v26, 128
    %43 = vxpose.xlu0.b32.cont [6/16] %v27, 128
    %44 = vxpose.xlu0.b32.cont [7/16] %v28, 128
    %45 = vxpose.xlu0.b32.cont [8/16] %v29, 128
    %46 = vxpose.xlu0.b32.cont [9/16] %v30, 128
    %47 = vxpose.xlu0.b32.cont [10/16] %v31, 128
    %48 = vxpose.xlu0.b32.cont [11/16] %v32, 128
    %49 = vxpose.xlu0.b32.cont [12/16] %v33, 128
    %50 = vxpose.xlu0.b32.cont [13/16] %v34, 128
    %51 = vxpose.xlu0.b32.cont [14/16] %v35, 128
    %52 = vxpose.xlu0.b32.cont [15/16] %v36, 128
    %53 = vxpose.xlu0.b32.end [16/16] %v37, 128
    %v54 = vpop.trf.xlu0
    %v55 = vpop.trf.xlu0
    %v56 = vpop.trf.xlu0
    %v57 = vpop.trf.xlu0
    %v58 = vpop.trf.xlu0
    %v59 = vpop.trf.xlu0
    %v60 = vpop.trf.xlu0
    %v61 = vpop.trf.xlu0
    %v62 = vpop.trf.xlu0
    %v63 = vpop.trf.xlu0
    %v64 = vpop.trf.xlu0
    %v65 = vpop.trf.xlu0
    %v66 = vpop.trf.xlu0
    %v67 = vpop.trf.xlu0
    %v68 = vpop.trf.xlu0
    %v69 = vpop.trf.xlu0
    %v70 = vpack.c.bf16 %v55, %v54
    %v71 = vpack.c.bf16 %v57, %v56
    %v72 = vld [vmem:[%s1] sm:$0xf]
    %v73 = vld [vmem:[%s1 + $0x4] sm:$0xf]
    %v74 = vld [vmem:[%s1 + $0x8] sm:$0xf]
    %v75 = vld [vmem:[%s1 + $0xc] sm:$0xf]
    %v76 = vld [vmem:[%s1 + $0x10] sm:$0xf]
    %v77 = vld [vmem:[%s1 + $0x14] sm:$0xf]
    %v78 = vld [vmem:[%s1 + $0x18] sm:$0xf]
    %v79 = vld [vmem:[%s1 + $0x1c] sm:$0xf]
    %v80 = vld [vmem:[%s2] sm:$0xff]
    %v81 = vld [vmem:[%s2 + $0x8] sm:$0xff]
    %v82 = vld [vmem:[%s2 + $0x10] sm:$0xff]
    %v83 = vld [vmem:[%s2 + $0x18] sm:$0xff]
    %v84 = vld [vmem:[%s2 + $0x20] sm:$0xff]
    %v85 = vld [vmem:[%s2 + $0x28] sm:$0xff]
    %v86 = vld [vmem:[%s2 + $0x30] sm:$0xff]
    %v87 = vld [vmem:[%s2 + $0x38] sm:$0xff]
    %89 = vset.pattern.permute.xlu0 0
    %90 = vperm.xlu0 %89, %v80
    %v91 = vpop.permute.xlu0 %90
    %94 = vset.pattern.permute.xlu0 0
    %95 = vperm.xlu0 %94, %v81
    %v96 = vpop.permute.xlu0 %95
    %99 = vset.pattern.permute.xlu0 0
    %100 = vperm.xlu0 %99, %v82
    %v101 = vpop.permute.xlu0 %100
    %104 = vset.pattern.permute.xlu0 0
    %105 = vperm.xlu0 %104, %v83
    %v106 = vpop.permute.xlu0 %105
    %109 = vset.pattern.permute.xlu0 0
    %110 = vperm.xlu0 %109, %v84
    %v111 = vpop.permute.xlu0 %110
    %114 = vset.pattern.permute.xlu0 0
    %115 = vperm.xlu0 %114, %v85
    %v116 = vpop.permute.xlu0 %115
    %119 = vset.pattern.permute.xlu0 0
    %120 = vperm.xlu0 %119, %v86
    %v121 = vpop.permute.xlu0 %120
    %124 = vset.pattern.permute.xlu0 0
    %125 = vperm.xlu0 %124, %v87
    %v126 = vpop.permute.xlu0 %125
    %v136 = vunpack.c.l.b16 %v72
    %v137 = vunpack.c.l.b16 %v73
    %v138 = vunpack.c.l.b16 %v74
    %v139 = vunpack.c.l.b16 %v75
    %v140 = vunpack.c.l.b16 %v76
    %v141 = vunpack.c.l.b16 %v77
    %v142 = vunpack.c.l.b16 %v78
    %v143 = vunpack.c.l.b16 %v79
    %v144 = vpack.c.b16 %v137, %v136
    %v145 = vpack.c.b16 %v139, %v138
    %v146 = vpack.c.b16 %v141, %v140
    %v147 = vpack.c.b16 %v143, %v142
    %vm148 = vcmask 261120
    %v150 = vsel %vm148, %v144, 0
    %v153 = vsel %vm148, %v145, 0
    %v156 = vsel %vm148, %v146, 0
    %v159 = vsel %vm148, %v147, 0
    %161 = vmatprep.subr.bf16.mxu0 0
    %162 = vmatpush1.bf16.msra.mxu0 %v70
    %163 = vmatprep.subr.bf16.mxu0 0
    %164 = vmatpush1.bf16.msra.mxu0 %v71
    %165 = vmatprep.subr.bf16.mxu0 0
    %166 = vmatpush1.bf16.msra.mxu0 0
    %167 = vmatprep.subr.bf16.mxu0 0
    %168 = vmatpush1.bf16.msra.mxu0 0
    %169 = vmatprep.subr.bf16.mxu0 0
    %170 = vmatpush1.bf16.msra.mxu0 0
    %171 = vmatprep.subr.bf16.mxu0 0
    %172 = vmatpush1.bf16.msra.mxu0 0
    %173 = vmatprep.subr.bf16.mxu0 0
    %174 = vmatpush1.bf16.msra.mxu0 0
    %175 = vmatprep.subr.bf16.mxu0 0
    %176 = vmatpush1.bf16.msra.mxu0 0
    %177 = vmatprep.subr.bf16.mxu0 0
    %178 = vmatpush1.bf16.msra.mxu0 0
    %179 = vmatprep.subr.bf16.mxu0 0
    %180 = vmatpush1.bf16.msra.mxu0 0
    %181 = vmatprep.subr.bf16.mxu0 0
    %182 = vmatpush1.bf16.msra.mxu0 0
    %183 = vmatprep.subr.bf16.mxu0 0
    %184 = vmatpush1.bf16.msra.mxu0 0
    %185 = vmatprep.subr.bf16.mxu0 0
    %186 = vmatpush1.bf16.msra.mxu0 0
    %187 = vmatprep.subr.bf16.mxu0 0
    %188 = vmatpush1.bf16.msra.mxu0 0
    %189 = vmatprep.subr.bf16.mxu0 0
    %190 = vmatpush1.bf16.msra.mxu0 0
    %191 = vmatprep.subr.bf16.mxu0 0
    %192 = vmatpush1.bf16.msra.mxu0 0
    %193 = vmatprep.mubr.bf16.mxu0 0
    %194 = vmatmul.mubr.bf16.gmra.mrb[0].mxu0 %v150
    %v195 = vpop.f32.mrb[0].mxu0
    %v196 = vadd.f32 %v91, %v195
    %v197 = vpop.f32.mrb[0].mxu0
    %v198 = vpop.f32.mrb[0].mxu0
    %v199 = vadd.f32 %v96, %v198
    %v200 = vpop.f32.mrb[0].mxu0
    %201 = vmatprep.mubr.bf16.mxu0 0
    %202 = vmatmul.mubr.bf16.gmra.mrb[0].mxu0 %v153
    %v203 = vpop.f32.mrb[0].mxu0
    %v204 = vadd.f32 %v101, %v203
    %v205 = vpop.f32.mrb[0].mxu0
    %v206 = vpop.f32.mrb[0].mxu0
    %v207 = vadd.f32 %v106, %v206
    %v208 = vpop.f32.mrb[0].mxu0
    %209 = vmatprep.mubr.bf16.mxu0 0
    %210 = vmatmul.mubr.bf16.gmra.mrb[0].mxu0 %v156
    %v211 = vpop.f32.mrb[0].mxu0
    %v212 = vadd.f32 %v111, %v211
    %v213 = vpop.f32.mrb[0].mxu0
    %v214 = vpop.f32.mrb[0].mxu0
    %v215 = vadd.f32 %v116, %v214
    %v216 = vpop.f32.mrb[0].mxu0
    %217 = vmatprep.mubr.bf16.mxu0 0
    %218 = vmatmul.mubr.bf16.gmra.mrb[0].mxu0 %v159
    %v219 = vpop.f32.mrb[0].mxu0
    %v220 = vadd.f32 %v121, %v219
    %v221 = vpop.f32.mrb[0].mxu0
    %v222 = vpop.f32.mrb[0].mxu0
    %v223 = vadd.f32 %v126, %v222
    %v224 = vpop.f32.mrb[0].mxu0
    %225 = vdwg.mxu0
    %v226 = vpack.c.bf16 %v199, %v196
    %v227 = vpack.c.bf16 %v207, %v204
    %v228 = vpack.c.bf16 %v215, %v212
    %v229 = vpack.c.bf16 %v223, %v220
    %v230 = vtanh.bf16.pop %v226
    %v231 = vtanh.bf16.pop %v227
    %v232 = vtanh.bf16.pop %v228
    %v233 = vtanh.bf16.pop %v229
    %v234 = vld [vmem:[%s3] sm:$0xf]
    %v235 = vld [vmem:[%s3 + $0x4] sm:$0xf]
    %v236 = vld [vmem:[%s3 + $0x8] sm:$0xf]
    %v237 = vld [vmem:[%s3 + $0xc] sm:$0xf]
    %v238 = vld [vmem:[%s4] sm:$0xff]
    %v239 = vld [vmem:[%s4 + $0x8] sm:$0xff]
    %v240 = vld [vmem:[%s4 + $0x10] sm:$0xff]
    %v241 = vld [vmem:[%s4 + $0x18] sm:$0xff]
    %243 = vset.pattern.permute.xlu0 0
    %244 = vperm.xlu0 %243, %v238
    %v245 = vpop.permute.xlu0 %244
    %248 = vset.pattern.permute.xlu0 0
    %249 = vperm.xlu0 %248, %v239
    %v250 = vpop.permute.xlu0 %249
    %253 = vset.pattern.permute.xlu0 0
    %254 = vperm.xlu0 %253, %v240
    %v255 = vpop.permute.xlu0 %254
    %258 = vset.pattern.permute.xlu0 0
    %259 = vperm.xlu0 %258, %v241
    %v260 = vpop.permute.xlu0 %259
    %v266 = vunpack.c.l.b16 %v234
    %v267 = vunpack.c.l.b16 %v235
    %v268 = vunpack.c.l.b16 %v236
    %v269 = vunpack.c.l.b16 %v237
    %v270 = vpack.c.b16 %v267, %v266
    %v271 = vpack.c.b16 %v269, %v268
    %vm272 = vcmask 523264
    %v274 = vsel %vm272, %v270, 0
    %v277 = vsel %vm272, %v271, 0
    %279 = vmatprep.subr.bf16.mxu0 0
    %280 = vmatpush1.bf16.msra.mxu0 %v230
    %281 = vmatprep.subr.bf16.mxu0 0
    %282 = vmatpush1.bf16.msra.mxu0 %v231
    %283 = vmatprep.subr.bf16.mxu0 0
    %284 = vmatpush1.bf16.msra.mxu0 %v232
    %285 = vmatprep.subr.bf16.mxu0 0
    %286 = vmatpush1.bf16.msra.mxu0 %v233
    %287 = vmatprep.subr.bf16.mxu0 0
    %288 = vmatpush1.bf16.msra.mxu0 0
    %289 = vmatprep.subr.bf16.mxu0 0
    %290 = vmatpush1.bf16.msra.mxu0 0
    %291 = vmatprep.subr.bf16.mxu0 0
    %292 = vmatpush1.bf16.msra.mxu0 0
    %293 = vmatprep.subr.bf16.mxu0 0
    %294 = vmatpush1.bf16.msra.mxu0 0
    %295 = vmatprep.subr.bf16.mxu0 0
    %296 = vmatpush1.bf16.msra.mxu0 0
    %297 = vmatprep.subr.bf16.mxu0 0
    %298 = vmatpush1.bf16.msra.mxu0 0
    %299 = vmatprep.subr.bf16.mxu0 0
    %300 = vmatpush1.bf16.msra.mxu0 0
    %301 = vmatprep.subr.bf16.mxu0 0
    %302 = vmatpush1.bf16.msra.mxu0 0
    %303 = vmatprep.subr.bf16.mxu0 0
    %304 = vmatpush1.bf16.msra.mxu0 0
    %305 = vmatprep.subr.bf16.mxu0 0
    %306 = vmatpush1.bf16.msra.mxu0 0
    %307 = vmatprep.subr.bf16.mxu0 0
    %308 = vmatpush1.bf16.msra.mxu0 0
    %309 = vmatprep.subr.bf16.mxu0 0
    %310 = vmatpush1.bf16.msra.mxu0 0
    %311 = vmatprep.mubr.bf16.mxu0 0
    %312 = vmatmul.mubr.bf16.gmra.mrb[0].mxu0 %v274
    %v313 = vpop.f32.mrb[0].mxu0
    %v314 = vadd.f32 %v245, %v313
    %v315 = vpop.f32.mrb[0].mxu0
    %v316 = vpop.f32.mrb[0].mxu0
    %v317 = vadd.f32 %v250, %v316
    %v318 = vpop.f32.mrb[0].mxu0
    %319 = vmatprep.mubr.bf16.mxu0 0
    %320 = vmatmul.mubr.bf16.gmra.mrb[0].mxu0 %v277
    %v321 = vpop.f32.mrb[0].mxu0
    %v322 = vadd.f32 %v255, %v321
    %v323 = vpop.f32.mrb[0].mxu0
    %v324 = vpop.f32.mrb[0].mxu0
    %v325 = vadd.f32 %v260, %v324
    %v326 = vpop.f32.mrb[0].mxu0
    %327 = vdwg.mxu0
    %v328 = vtanh.pop %v314
    %v329 = vtanh.pop %v317
    %v330 = vtanh.pop %v322
    %v331 = vtanh.pop %v325
    %332 = vxpose.xlu0.b32.start [1/16] %v328, 128
    %333 = vxpose.xlu0.b32.cont [2/16] %v329, 128
    %334 = vxpose.xlu0.b32.cont [3/16] %v330, 128
    %335 = vxpose.xlu0.b32.cont [4/16] %v331, 128
    %336 = vxpose.xlu0.b32.cont [5/16] 0.0, 128
    %337 = vxpose.xlu0.b32.cont [6/16] 0.0, 128
    %338 = vxpose.xlu0.b32.cont [7/16] 0.0, 128
    %339 = vxpose.xlu0.b32.cont [8/16] 0.0, 128
    %340 = vxpose.xlu0.b32.cont [9/16] 0.0, 128
    %341 = vxpose.xlu0.b32.cont [10/16] 0.0, 128
    %342 = vxpose.xlu0.b32.cont [11/16] 0.0, 128
    %343 = vxpose.xlu0.b32.cont [12/16] 0.0, 128
    %344 = vxpose.xlu0.b32.cont [13/16] 0.0, 128
    %345 = vxpose.xlu0.b32.cont [14/16] 0.0, 128
    %346 = vxpose.xlu0.b32.cont [15/16] 0.0, 128
    %347 = vxpose.xlu0.b32.end [16/16] 0.0, 128
    %v348 = vpop.trf.xlu0
    %v349 = vpop.trf.xlu0
    %v350 = vpop.trf.xlu0
    %v351 = vpop.trf.xlu0
    %v352 = vpop.trf.xlu0
    %v353 = vpop.trf.xlu0
    %v354 = vpop.trf.xlu0
    %v355 = vpop.trf.xlu0
    %v356 = vpop.trf.xlu0
    %v357 = vpop.trf.xlu0
    %v358 = vpop.trf.xlu0
    %v359 = vpop.trf.xlu0
    %v360 = vpop.trf.xlu0
    %v361 = vpop.trf.xlu0
    %v362 = vpop.trf.xlu0
    %v363 = vpop.trf.xlu0
    %364 = vst.msk [vmem:[#allocation2] sm:$0xff] %vm148, %v348
    %365 = vst.msk [vmem:[#allocation2 + $0x8] sm:$0xff] %vm148, %v349
    %366 = vst.msk [vmem:[#allocation2 + $0x10] sm:$0xff] %vm148, %v350
    %367 = vst.msk [vmem:[#allocation2 + $0x18] sm:$0xff] %vm148, %v351
    %368 = vst.msk [vmem:[#allocation2 + $0x20] sm:$0xff] %vm148, %v352
    %369 = vst.msk [vmem:[#allocation2 + $0x28] sm:$0xff] %vm148, %v353
    %370 = vst.msk [vmem:[#allocation2 + $0x30] sm:$0xff] %vm148, %v354
    %371 = vst.msk [vmem:[#allocation2 + $0x38] sm:$0xff] %vm148, %v355
    %372 = vst.msk [vmem:[#allocation2 + $0x40] sm:$0xff] %vm148, %v356
    %373 = vst.msk [vmem:[#allocation2 + $0x48] sm:$0xff] %vm148, %v357
    %374 = vst.msk [vmem:[#allocation2 + $0x50] sm:$0xff] %vm148, %v358
    %375 = vst.msk [vmem:[#allocation2 + $0x58] sm:$0xff] %vm148, %v359
    %376 = vst.msk [vmem:[#allocation2 + $0x60] sm:$0xff] %vm148, %v360
    %377 = vst.msk [vmem:[#allocation2 + $0x68] sm:$0xff] %vm148, %v361
    %378 = vst.msk [vmem:[#allocation2 + $0x70] sm:$0xff] %vm148, %v362
    %379 = vst.msk [vmem:[#allocation2 + $0x78] sm:$0xff] %vm148, %v363
    // Predicated region
    $region22: #{tpu_custom_call.1} parent=1 // pred_check
      _
    $region23: #{tpu_custom_call.1} parent=1 // pred_check_branch
      %381 = sbr.rel (0) target = $region25
    $region24: #{tpu_custom_call.1} parent=1 // pred_region
      %s383 = ssub.s32 2048, 256
      %384 = vsyncadd [#allocation3], %s383
      %s385 = sshll.u32 [#allocation2], 4
      %s386 = int_to_ptr.vmem [resolvable:$true] %s385
      %391 = dma.vmem_to_hbm [thread:$0]  %s386, 256, %s5, [#allocation3], 128, 128, 8
    $region25: #{tpu_custom_call.1} parent=1 // pred_fallthru
      _
    // Predicated region
    $region26: #{tpu_custom_call.1} parent=1 // pred_check
      _
    $region27: #{tpu_custom_call.1} parent=1 // pred_check_branch
      %393 = sbr.rel (0) target = $region29
    $region28: #{tpu_custom_call.1} parent=1 // pred_region
      %394 = dma.done [#allocation3], 2048
    $region29: #{tpu_custom_call.1} parent=1 // pred_fallthru
      _
    %395 = vsyncpa [#allocation3], 1

</llo_original>
